<compile_context>
chip_gen: v7x
topology: tpu7x:2x2x1
jax: 0.10.0
libtpu: 0.0.40
codegen_flags: <defaults>
</compile_context>

<pallas_src>
import functools

import jax
import jax.numpy as jnp
from jax import lax
from jax.experimental import pallas as pl
from jax.experimental.pallas import tpu as pltpu


def _bce_wordsim_kernel(logits_ref, embl_ref, embt_ref, out_ref, acc_ref,
                        *, denom, n_valid, tn, inner):
    """One grid step processes a (B, tn) tile of logits.

    logits_ref : (B, tn)      tile of logits (f32)
    embl_ref   : (B, D)       L2-normalized label rows (table dtype)
    embt_ref   : (D, tn)      RAW transposed table tile (table dtype)
    out_ref    : (1, 1, 128)  per-chunk partial-sum output (lane-broadcast)
    acc_ref    : (B, tn)      VMEM vector accumulator (per-core scratch)
    """
    c = pl.program_id(0)
    j = pl.program_id(1)

    @pl.when(j == 0)
    def _():
        acc_ref[...] = jnp.zeros_like(acc_ref)

    # Fused F.normalize(dim=-1, eps=1e-12) of the table columns, folded into
    # the matmul result instead of materializing a normalized (D, tn) tile.
    emb = embt_ref[...]                                            # (D, tn)
    emb_sq = emb.astype(jnp.float32)
    sumsq = jnp.sum(emb_sq * emb_sq, axis=0, keepdims=True)       # (1, tn)
    inv_norm = 1.0 / jnp.maximum(jnp.sqrt(sumsq), 1e-12)          # (1, tn)

    # sim[b, n] = <emb_norm[label[b]], emb_tab[:, n]> * inv_norm[n]
    # MXU-native contraction (lhs last dim x rhs first dim) -> no transpose.
    sim = lax.dot_general(
        embl_ref[...], emb,
        dimension_numbers=(((1,), (0,)), ((), ())),
        preferred_element_type=jnp.float32)                        # (B, tn)
    sim = sim * inv_norm

    x = logits_ref[...].astype(jnp.float32)
    # clamp(x, min=0) - x * word_sim + log(1 + exp(-|x|))
    loss = jnp.maximum(x, 0.0) - x * sim + jnp.log1p(jnp.exp(-jnp.abs(x)))

    if n_valid is not None:
        # Masked (padded) last tile: zero out columns >= N.
        base = (c * inner + j) * tn
        col = base + lax.broadcasted_iota(jnp.int32, loss.shape, 1)
        loss = jnp.where(col < n_valid, loss, 0.0)

    # Elementwise VPU accumulate; the cross-lane reduce happens only once.
    acc_ref[...] += loss

    @pl.when(j == pl.num_programs(1) - 1)
    def _():
        s = jnp.sum(acc_ref[...]) * jnp.float32(1.0 / denom)
        out_ref[...] = jnp.broadcast_to(s, out_ref.shape)


def _pick_tn(N, B, D, *, table_bytes=2, budget_bytes=24 * 1024 * 1024,
             max_tn=8192):
    """Largest vocab tile that keeps the double-buffered working set under
    the VMEM budget.  Prefers an exact divisor of N (no masked tail) when a
    large one exists; otherwise the in-kernel masked tail handles N % tn."""
    # 2x (B,tn) f32 logits + 2x (D,tn) table + (B,tn) f32 accumulator.
    per_tn = 2 * B * 4 + 2 * D * table_bytes + B * 4
    fixed = 2 * B * D * 4 + 2 * 128 * 4          # resident label rows + out
    cap = max(128, (budget_bytes - fixed) // per_tn)
    cap = min(cap, max_tn)
    if N <= cap:
        return int(N)                             # single full-width tile
    tn = (cap // 128) * 128
    for cand in range(tn, tn // 2, -128):         # prefer a large exact divisor
        if N % cand == 0:
            return cand
    return tn                                     # masked tail covers the rest


def _detect_num_tensorcores():
    """Conservative TensorCore-per-chip detection for CORE_PARALLEL chunking.
    Returns 1 on any uncertainty (safe serial path)."""
    try:
        info = pltpu.get_tpu_info()
    except Exception:
        return 1
    for name in ("num_tensorcores", "tensorcore_count", "num_cores",
                 "cores_per_chip"):
        v = getattr(info, name, None)
        if isinstance(v, int) and v in (1, 2):
            return v
    return 1


def bce_with_word_sim(logits, label, word_emb_tab, *, reduction="mean",
                      tn=None, table_dtype=jnp.bfloat16, num_cores="auto"):
    """Pallas implementation of BCEwithWordSim.forward.

    logits       : (B, N) float32
    label        : (B,)   int32 indices into the vocab / embedding table
    word_emb_tab : (N, D) float32 word embedding table (raw, un-normalized)
    table_dtype  : streaming dtype of the table (bf16 default; f32 for exact
                   parity with the f32 reference)
    num_cores    : "auto" | int -- >= 2 enables CORE_PARALLEL vocab chunking
                   on 2-TensorCore parts (v7x / megacore)
    """
    B, N = logits.shape
    V, D = word_emb_tab.shape
    assert V == N, "vocab size of logits must match embedding table"

    logits = logits.astype(jnp.float32)
    table_f32 = word_emb_tab.astype(jnp.float32)

    # ---- one-time parameter prep (the PyTorch module precomputes its sim
    # matrix in __init__): cast the table to the streaming dtype and lay it
    # out (D, N) so the kernel tiles are MXU/lane friendly.
    table_t = jnp.asarray(table_f32.T, dtype=table_dtype)           # (D, N)

    # ---- tiny per-call glue: gather + normalize the B label rows in f32.
    emb_label = jnp.take(table_f32, label, axis=0)                  # (B, D)
    nrm = jnp.maximum(
        jnp.sqrt(jnp.sum(emb_label * emb_label, axis=-1, keepdims=True)),
        1e-12)
    emb_label = (emb_label / nrm).astype(table_dtype)

    if reduction == "mean":
        denom = float(B * N)
    elif reduction == "sum":
        denom = 1.0
    else:
        # TODO(synk): reduction='none' would need a (B, N) output; only
        # 'mean'/'sum' are implemented here (module default is 'mean').
        raise NotImplementedError(reduction)

    tbl_bytes = jnp.dtype(table_dtype).itemsize
    if tn is None:
        tn = _pick_tn(N, B, D, table_bytes=tbl_bytes)
    tn = min(int(tn), N)
    assert tn == N or tn % 128 == 0, "tn must be a multiple of 128 (or == N)"

    n_tiles = -(-N // tn)
    padded = (N % tn != 0)

    # ---- TensorCore chunking: only CORE_PARALLEL actually splits the grid
    # across cores; plain "parallel" does not change codegen, so single-chunk
    # serial is the default on 1-TC chips.
    if num_cores == "auto":
        num_cores = _detect_num_tensorcores()
    core_parallel = getattr(pltpu, "CORE_PARALLEL", None)
    if (num_cores >= 2 and core_parallel is not None
            and n_tiles >= num_cores and n_tiles % num_cores == 0):
        num_chunks = int(num_cores)
        semantics = (core_parallel, pltpu.ARBITRARY)
    else:
        num_chunks = 1
        semantics = ("arbitrary", "arbitrary")
    inner = n_tiles // num_chunks

    kernel = functools.partial(
        _bce_wordsim_kernel, denom=denom,
        n_valid=(N if padded else None), tn=tn, inner=inner)

    cost = pl.CostEstimate(
        flops=int(2 * B * N * D + 3 * N * D + 10 * B * N),
        transcendentals=int(2 * B * N),
        bytes_accessed=int(N * D * tbl_bytes + B * N * 4 + B * D * tbl_bytes
                           + num_chunks * 128 * 4),
    )

    partials = pl.pallas_call(
        kernel,
        out_shape=jax.ShapeDtypeStruct((num_chunks, 1, 128), jnp.float32),
        grid_spec=pltpu.PrefetchScalarGridSpec(
            num_scalar_prefetch=0,
            grid=(num_chunks, inner),
            in_specs=[
                # logits tile
                pl.BlockSpec((B, tn), lambda c, j: (0, c * inner + j)),
                # gathered + normalized label rows (resident across the grid)
                pl.BlockSpec((B, D), lambda c, j: (0, 0)),
                # raw transposed embedding-table tile (normalization is fused
                # into the sim result in-kernel).
                # TODO(synk): pipeline_mode=pl.Buffered(3) here if xprof shows
                # exposed DMA gaps at the short v7x step times.
                pl.BlockSpec((D, tn), lambda c, j: (0, c * inner + j)),
            ],
            out_specs=pl.BlockSpec((1, 1, 128), lambda c, j: (c, 0, 0)),
            scratch_shapes=[pltpu.VMEM((B, tn), jnp.float32)],
        ),
        compiler_params=pltpu.CompilerParams(
            dimension_semantics=semantics,
            vmem_limit_bytes=32 * 1024 * 1024,
        ),
        cost_estimate=cost,
    )(logits, emb_label, table_t)

    return jnp.sum(partials[:, 0, 0])


def _reference(logits, label, word_emb_tab, reduction="mean"):
    norm = jnp.maximum(
        jnp.sqrt(jnp.sum(word_emb_tab * word_emb_tab, axis=-1, keepdims=True)),
        1e-12)
    n = word_emb_tab / norm
    word_sim = (n @ n.T)[label]
    x = logits
    loss = jnp.maximum(x, 0.0) - x * word_sim + jnp.log1p(jnp.exp(-jnp.abs(x)))
    if reduction == "sum":
        return jnp.sum(loss)
    return jnp.mean(loss)


if __name__ == "__main__":
    key = jax.random.PRNGKey(0)
    k1, k2, k3 = jax.random.split(key, 3)

    B, N, D = 8, 256, 128  # batch, vocab size, embedding dim

    word_emb_tab = jax.random.normal(k1, (N, D), dtype=jnp.float32)
    logits = jax.random.normal(k2, (B, N), dtype=jnp.float32) * 2.0
    label = jax.random.randint(k3, (B,), 0, N, dtype=jnp.int32)

    ref_mean = _reference(logits, label, word_emb_tab, "mean")

    # 1) exact-parity path: f32 table stream, single full-width tile.
    out_f32 = jax.block_until_ready(
        bce_with_word_sim(logits, label, word_emb_tab, reduction="mean",
                          table_dtype=jnp.float32))
    assert jnp.allclose(out_f32, ref_mean, rtol=1e-5, atol=1e-5), (
        out_f32, ref_mean)

    # 2) default fast path: bf16 table stream (halves the dominant HBM
    #    stream); looser tolerance vs the f32 reference.
    out_bf16 = jax.block_until_ready(
        bce_with_word_sim(logits, label, word_emb_tab, reduction="mean"))
    assert jnp.allclose(out_bf16, ref_mean, rtol=1e-2, atol=1e-2), (
        out_bf16, ref_mean)

    # 3) multi-tile + masked padded-tail path: awkward vocab (N=200), tn=128.
    N2 = 200
    wet2 = jax.random.normal(k1, (N2, D), dtype=jnp.float32)
    logits2 = jax.random.normal(k2, (B, N2), dtype=jnp.float32) * 2.0
    label2 = jax.random.randint(k3, (B,), 0, N2, dtype=jnp.int32)
    out_sum = jax.block_until_ready(
        bce_with_word_sim(logits2, label2, wet2, reduction="sum", tn=128,
                          table_dtype=jnp.float32))
    ref_sum = _reference(logits2, label2, wet2, "sum")
    assert jnp.allclose(out_sum, ref_sum, rtol=1e-4, atol=1e-3), (
        out_sum, ref_sum)

    print("KERNEL_OK")
</pallas_src>

<mosaic_0001>
module attributes {stable_mosaic.version = 11 : i64} {
  func.func @_bce_wordsim_kernel(%arg0: i32, %arg1: i32, %arg2: memref<8x256xf32, #tpu.memory_space<vmem>>, %arg3: memref<8x128xf32, #tpu.memory_space<vmem>>, %arg4: memref<128x256xf32, #tpu.memory_space<vmem>>, %arg5: memref<1x1x128xf32, #tpu.memory_space<vmem>>, %arg6: memref<8x256xf32, #tpu.memory_space<vmem>>) attributes {dimension_semantics = [#tpu.dimension_semantics<arbitrary>, #tpu.dimension_semantics<arbitrary>], iteration_bounds = array<i64: 1, 1>, scalar_prefetch = 0 : i64, scratch_operands = 1 : i64, tpu.core_type = #tpu.core_type<tc>, window_params = [{transform_indices = @transform_0, window_bounds = array<i64: 8, 256>}, {pipeline_mode = #tpu.pipeline_mode<synchronous>, transform_indices = @transform_1, window_bounds = array<i64: 8, 128>}, {transform_indices = @transform_2, window_bounds = array<i64: 128, 256>}, {transform_indices = @transform_3, window_bounds = array<i64: 1, 1, 128>}]} {
    %c0_i32 = arith.constant 0 : i32
    %0 = arith.cmpi eq, %arg1, %c0_i32 : i32
    %1 = arith.extui %0 : i1 to i32
    %c0_i32_0 = arith.constant 0 : i32
    %2 = arith.cmpi ne, %1, %c0_i32_0 : i32
    scf.if %2 {
      %cst_17 = arith.constant 0.000000e+00 : f32
      %33 = vector.broadcast %cst_17 : f32 to vector<8x256xf32>
      %c0_18 = arith.constant 0 : index
      %c0_19 = arith.constant 0 : index
      %34 = vector.load %arg6[%c0_18, %c0_19] : memref<8x256xf32, #tpu.memory_space<vmem>>, vector<8x256xf32>
      tpu.vector_store %arg6[%c0_18, %c0_19], %33 {strides = array<i32>} : memref<8x256xf32, #tpu.memory_space<vmem>>, vector<8x256xf32>,
    } else {
    }
    %c0 = arith.constant 0 : index
    %c0_1 = arith.constant 0 : index
    %3 = vector.load %arg4[%c0, %c0_1] : memref<128x256xf32, #tpu.memory_space<vmem>>, vector<128x256xf32>
    %4 = arith.mulf %3, %3 : vector<128x256xf32>
    %cst = arith.constant dense<0.000000e+00> : vector<256xf32>
    %5 = vector.multi_reduction <add>, %4, %cst [0] : vector<128x256xf32> to vector<256xf32>
    %6 = vector.shape_cast %5 : vector<256xf32> to vector<1x256xf32>
    %7 = math.sqrt %6 : vector<1x256xf32>
    %cst_2 = arith.constant 9.99999996E-13 : f32
    %8 = vector.broadcast %cst_2 : f32 to vector<1x256xf32>
    %9 = arith.maximumf %7, %8 : vector<1x256xf32>
    %cst_3 = arith.constant 1.000000e+00 : f32
    %10 = vector.broadcast %cst_3 : f32 to vector<1x256xf32>
    %11 = arith.divf %10, %9 : vector<1x256xf32>
    %c0_4 = arith.constant 0 : index
    %c0_5 = arith.constant 0 : index
    %12 = vector.load %arg3[%c0_4, %c0_5] : memref<8x128xf32, #tpu.memory_space<vmem>>, vector<8x128xf32>
    %cst_6 = arith.constant dense<0.000000e+00> : vector<8x256xf32>
    %13 = tpu.matmul %12, %3, %cst_6 {dimension_numbers = #tpu.dot_dimension_numbers<[1], [0], [0], [1], [0, 0, 1, 1], [], []>} : vector<8x128xf32>, vector<128x256xf32>, vector<8x256xf32> -> vector<8x256xf32>
    %14 = vector.broadcast %11 : vector<1x256xf32> to vector<8x256xf32>
    %15 = arith.mulf %13, %14 : vector<8x256xf32>
    %c0_7 = arith.constant 0 : index
    %c0_8 = arith.constant 0 : index
    %16 = vector.load %arg2[%c0_7, %c0_8] : memref<8x256xf32, #tpu.memory_space<vmem>>, vector<8x256xf32>
    %cst_9 = arith.constant 0.000000e+00 : f32
    %17 = vector.broadcast %cst_9 : f32 to vector<8x256xf32>
    %18 = arith.maximumf %16, %17 : vector<8x256xf32>
    %19 = arith.mulf %16, %15 : vector<8x256xf32>
    %20 = arith.subf %18, %19 : vector<8x256xf32>
    %21 = math.absf %16 : vector<8x256xf32>
    %cst_10 = arith.constant 0.000000e+00 : f32
    %22 = vector.broadcast %cst_10 : f32 to vector<8x256xf32>
    %23 = arith.subf %22, %21 : vector<8x256xf32>
    %24 = math.exp %23 : vector<8x256xf32>
    %25 = math.log1p %24 : vector<8x256xf32>
    %26 = arith.addf %20, %25 : vector<8x256xf32>
    %c0_11 = arith.constant 0 : index
    %c0_12 = arith.constant 0 : index
    %27 = vector.load %arg6[%c0_11, %c0_12] : memref<8x256xf32, #tpu.memory_space<vmem>>, vector<8x256xf32>
    %28 = arith.addf %27, %26 : vector<8x256xf32>
    %c0_13 = arith.constant 0 : index
    %c0_14 = arith.constant 0 : index
    %29 = vector.load %arg6[%c0_13, %c0_14] : memref<8x256xf32, #tpu.memory_space<vmem>>, vector<8x256xf32>
    tpu.vector_store %arg6[%c0_13, %c0_14], %28 {strides = array<i32>} : memref<8x256xf32, #tpu.memory_space<vmem>>, vector<8x256xf32>,
    %c0_i32_15 = arith.constant 0 : i32
    %30 = arith.cmpi eq, %arg1, %c0_i32_15 : i32
    %31 = arith.extui %30 : i1 to i32
    %c0_i32_16 = arith.constant 0 : i32
    %32 = arith.cmpi ne, %31, %c0_i32_16 : i32
    scf.if %32 {
      %c0_17 = arith.constant 0 : index
      %c0_18 = arith.constant 0 : index
      %33 = vector.load %arg6[%c0_17, %c0_18] : memref<8x256xf32, #tpu.memory_space<vmem>>, vector<8x256xf32>
      %34 = vector.shape_cast %33 : vector<8x256xf32> to vector<1x8x256xf32>
      %cst_19 = arith.constant dense<0.000000e+00> : vector<1xf32>
      %35 = vector.multi_reduction <add>, %34, %cst_19 [1, 2] : vector<1x8x256xf32> to vector<1xf32>
      %36 = vector.shape_cast %35 : vector<1xf32> to vector<1x1x1xf32>
      %37 = vector.extract %36[0, 0, 0] : f32 from vector<1x1x1xf32>
      %cst_20 = arith.constant 4.8828125E-4 : f32
      %38 = arith.mulf %37, %cst_20 : f32
      %39 = vector.broadcast %38 : f32 to vector<1x1x128xf32>
      %c0_21 = arith.constant 0 : index
      %c0_22 = arith.constant 0 : index
      %c0_23 = arith.constant 0 : index
      %40 = vector.load %arg5[%c0_21, %c0_22, %c0_23] : memref<1x1x128xf32, #tpu.memory_space<vmem>>, vector<1x1x128xf32>
      tpu.vector_store %arg5[%c0_21, %c0_22, %c0_23], %39 {strides = array<i32>} : memref<1x1x128xf32, #tpu.memory_space<vmem>>, vector<1x1x128xf32>,
    } else {
    }
    return
  }
  func.func @transform_0(%arg0: i32, %arg1: i32) -> (i32, i32) {
    %c1_i32 = arith.constant 1 : i32
    %0 = arith.muli %arg0, %c1_i32 : i32
    %1 = arith.addi %0, %arg1 : i32
    %c0_i32 = arith.constant 0 : i32
    %c0_i32_0 = arith.constant 0 : i32
    return %c0_i32, %1 : i32, i32
  }
  func.func @transform_1(%arg0: i32, %arg1: i32) -> (i32, i32) {
    %c0_i32 = arith.constant 0 : i32
    %c0_i32_0 = arith.constant 0 : i32
    %c0_i32_1 = arith.constant 0 : i32
    return %c0_i32, %c0_i32_0 : i32, i32
  }
  func.func @transform_2(%arg0: i32, %arg1: i32) -> (i32, i32) {
    %c1_i32 = arith.constant 1 : i32
    %0 = arith.muli %arg0, %c1_i32 : i32
    %1 = arith.addi %0, %arg1 : i32
    %c0_i32 = arith.constant 0 : i32
    %c0_i32_0 = arith.constant 0 : i32
    return %c0_i32, %1 : i32, i32
  }
  func.func @transform_3(%arg0: i32, %arg1: i32) -> (i32, i32, i32) {
    %c0_i32 = arith.constant 0 : i32
    %c0_i32_0 = arith.constant 0 : i32
    %c0_i32_1 = arith.constant 0 : i32
    return %arg0, %c0_i32, %c0_i32_0 : i32, i32, i32
  }
}

</mosaic_0001>

<llo_original>
// kernel: tpu_custom_call.1
$region0: #{tpu_custom_call.1}
  #allocation0 [shape = 'u32[]', space=smem, size = 0x4, offset = 0x4, fixed_abs, tag = 'smem constant byte address 0x4 - core index']
  #allocation1 [shape = 'u32[144,128]{1,0:T(1,128)}', space=vmem, size = 0x12000, scoped, tag = 'internal scratch']
  #allocation2 [shape = 'f32[8,256]{1,0:T(8,128)}', space=vmem, size = 0x2000, scoped, tag = 'scratch operand']
  %s0 = inlined_call_operand.hbm [shape: f32[8,256], index: 0, kind: input, shape index: {}]
  %s1 = inlined_call_operand.hbm [shape: f32[8,128], index: 1, kind: input, shape index: {}]
  %s2 = inlined_call_operand.hbm [shape: f32[128,256], index: 2, kind: input, shape index: {}]
  %s3 = inlined_call_operand.hbm [shape: f32[1,1,128], index: 3, kind: output, shape index: {}]
  %s4 = sld [smem:[#allocation0]]
  $region42: #{tpu_custom_call.1} parent=0
    _
  %s6 = ssub.s32 1, %s4
  %s7 = scalar_select 0, %s6, %s4
  $region1: #{tpu_custom_call.1} parent=0
    #allocation3 [shape = 'u8[8192]{0}', space=vmem, size = 0x2000, scoped, tag = 'input window, operand 0, single buffered']
    #allocation4 [shape = 's32[1]{0}', space=sflag, size = 0x4, scoped, tag = 'scoped memory for tpu_custom_call.1']
    #allocation5 [shape = 's32[1]{0}', space=sflag, size = 0x4, scoped, tag = 'scoped memory for tpu_custom_call.1']
    #allocation6 [shape = 'u8[4096]{0}', space=vmem, size = 0x1000, scoped, tag = 'input window, operand 1, single buffered']
    #allocation7 [shape = 's32[1]{0}', space=sflag, size = 0x4, scoped, tag = 'scoped memory for tpu_custom_call.1']
    #allocation8 [shape = 'u8[131072]{0}', space=vmem, size = 0x20000, scoped, tag = 'input window, operand 2, single buffered']
    #allocation9 [shape = 'u8[512]{0}', space=vmem, size = 0x400, scoped, tag = 'output window, operand 0, single buffered']
    %8 = vsyncpa [#allocation4], 0
    %9 = vsyncpa [#allocation7], 0
    %10 = vsyncpa [#allocation5], 0
    // Predicated region
    $region2: #{tpu_custom_call.1} parent=1 // pred_check
      _
    $region3: #{tpu_custom_call.1} parent=1 // pred_check_branch
      %12 = sbr.rel (0) target = $region5
    $region4: #{tpu_custom_call.1} parent=1 // pred_region
      %s13 = sadd.s32 0, 0
      %s14 = smul.u32 2, %s13
      %s16 = ssub.s32 256, 256
      %17 = vsyncadd [#allocation4], %s16
      %s18 = smul.addr %s14, 128
      %s19 = scalar_lea.hbm %s0, %s18
      %s21 = sshll.u32 [#allocation3], 4
      %s22 = int_to_ptr.vmem [resolvable:$true] %s21
      %24 = dma.hbm_to_vmem [thread:$0]  %s19, 256, %s22, [#allocation4]
    $region5: #{tpu_custom_call.1} parent=1 // pred_fallthru
      _
    // Predicated region
    $region6: #{tpu_custom_call.1} parent=1 // pred_check
      _
    $region7: #{tpu_custom_call.1} parent=1 // pred_check_branch
      %26 = sbr.rel (0) target = $region9
    $region8: #{tpu_custom_call.1} parent=1 // pred_region
      %s28 = ssub.s32 128, 128
      %29 = vsyncadd [#allocation7], %s28
      %s31 = sshll.u32 [#allocation6], 4
      %s32 = int_to_ptr.vmem [resolvable:$true] %s31
      %34 = dma.hbm_to_vmem [thread:$0]  %s1, 128, %s32, [#allocation7]
    $region9: #{tpu_custom_call.1} parent=1 // pred_fallthru
      _
    // Predicated region
    $region10: #{tpu_custom_call.1} parent=1 // pred_check
      _
    $region11: #{tpu_custom_call.1} parent=1 // pred_check_branch
      %36 = sbr.rel (0) target = $region13
    $region12: #{tpu_custom_call.1} parent=1 // pred_region
      %s37 = sadd.s32 0, 0
      %s38 = smul.u32 2, %s37
      %s40 = ssub.s32 4096, 4096
      %41 = vsyncadd [#allocation7], %s40
      %s42 = smul.addr %s38, 128
      %s43 = scalar_lea.hbm %s2, %s42
      %s44 = sshll.u32 [#allocation8], 4
      %s45 = int_to_ptr.vmem [resolvable:$true] %s44
      %50 = dma.hbm_to_vmem [thread:$0]  %s43, 4096, %s45, [#allocation7], 256, 256, 16
    $region13: #{tpu_custom_call.1} parent=1 // pred_fallthru
      _
    // Predicated region
    $region14: #{tpu_custom_call.1} parent=1 // pred_check
      _
    $region15: #{tpu_custom_call.1} parent=1 // pred_check_branch
      %52 = sbr.rel (0) target = $region17
    $region16: #{tpu_custom_call.1} parent=1 // pred_region
      %53 = dma.done [#allocation4], 256
    $region17: #{tpu_custom_call.1} parent=1 // pred_fallthru
      _
    // Predicated region
    $region18: #{tpu_custom_call.1} parent=1 // pred_check
      _
    $region19: #{tpu_custom_call.1} parent=1 // pred_check_branch
      %55 = sbr.rel (0) target = $region21
    $region20: #{tpu_custom_call.1} parent=1 // pred_region
      %56 = dma.done [#allocation7], 128
    $region21: #{tpu_custom_call.1} parent=1 // pred_fallthru
      _
    // Predicated region
    $region22: #{tpu_custom_call.1} parent=1 // pred_check
      _
    $region23: #{tpu_custom_call.1} parent=1 // pred_check_branch
      %58 = sbr.rel (0) target = $region25
    $region24: #{tpu_custom_call.1} parent=1 // pred_region
      %59 = dma.done [#allocation7], 4096
    $region25: #{tpu_custom_call.1} parent=1 // pred_fallthru
      _
    %s60 = sadd.s32 0, 0
    %s61 = smul.u32 2, %s60
    %s62 = sadd.s32 0, 0
    %s63 = smul.u32 2, %s62
    %p64 = scmp.eq.s32.totalorder 0, 0
    // Predicated region
    $region26: #{tpu_custom_call.1} parent=1 // pred_check
      %p65 = pneg %p64
    $region27: #{tpu_custom_call.1} parent=1 // pred_check_branch
      %67 = sbr.rel (%p65) target = $region29
    $region28: #{tpu_custom_call.1} parent=1 // pred_region
      %68 = vst [vmem:[#allocation2] sm:$0xff] 0.0
      %69 = vst [vmem:[#allocation2 + $0x8] sm:$0xff] 0.0
    $region29: #{tpu_custom_call.1} parent=1 // pred_fallthru
      _
    %v70 = vld [vmem:[#allocation8] sm:$0xff]
    %v71 = vld [vmem:[#allocation8 + $0x8] sm:$0xff]
    %v72 = vld [vmem:[#allocation8 + $0x10] sm:$0xff]
    %v73 = vld [vmem:[#allocation8 + $0x18] sm:$0xff]
    %v74 = vld [vmem:[#allocation8 + $0x20] sm:$0xff]
    %v75 = vld [vmem:[#allocation8 + $0x28] sm:$0xff]
    %v76 = vld [vmem:[#allocation8 + $0x30] sm:$0xff]
    %v77 = vld [vmem:[#allocation8 + $0x38] sm:$0xff]
    %v78 = vld [vmem:[#allocation8 + $0x40] sm:$0xff]
    %v79 = vld [vmem:[#allocation8 + $0x48] sm:$0xff]
    %v80 = vld [vmem:[#allocation8 + $0x50] sm:$0xff]
    %v81 = vld [vmem:[#allocation8 + $0x58] sm:$0xff]
    %v82 = vld [vmem:[#allocation8 + $0x60] sm:$0xff]
    %v83 = vld [vmem:[#allocation8 + $0x68] sm:$0xff]
    %v84 = vld [vmem:[#allocation8 + $0x70] sm:$0xff]
    %v85 = vld [vmem:[#allocation8 + $0x78] sm:$0xff]
    %v86 = vld [vmem:[#allocation8 + $0x80] sm:$0xff]
    %v87 = vld [vmem:[#allocation8 + $0x88] sm:$0xff]
    %v88 = vld [vmem:[#allocation8 + $0x90] sm:$0xff]
    %v89 = vld [vmem:[#allocation8 + $0x98] sm:$0xff]
    %v90 = vld [vmem:[#allocation8 + $0xa0] sm:$0xff]
    %v91 = vld [vmem:[#allocation8 + $0xa8] sm:$0xff]
    %v92 = vld [vmem:[#allocation8 + $0xb0] sm:$0xff]
    %v93 = vld [vmem:[#allocation8 + $0xb8] sm:$0xff]
    %v94 = vld [vmem:[#allocation8 + $0xc0] sm:$0xff]
    %v95 = vld [vmem:[#allocation8 + $0xc8] sm:$0xff]
    %v96 = vld [vmem:[#allocation8 + $0xd0] sm:$0xff]
    %v97 = vld [vmem:[#allocation8 + $0xd8] sm:$0xff]
    %v98 = vld [vmem:[#allocation8 + $0xe0] sm:$0xff]
    %v99 = vld [vmem:[#allocation8 + $0xe8] sm:$0xff]
    %v100 = vld [vmem:[#allocation8 + $0xf0] sm:$0xff]
    %v101 = vld [vmem:[#allocation8 + $0xf8] sm:$0xff]
    %v102 = vmul.f32 %v70, %v70
    %v103 = vmul.f32 %v71, %v71
    %v104 = vmul.f32 %v72, %v72
    %v105 = vmul.f32 %v73, %v73
    %v106 = vmul.f32 %v74, %v74
    %v107 = vmul.f32 %v75, %v75
    %v108 = vmul.f32 %v76, %v76
    %v109 = vmul.f32 %v77, %v77
    %v110 = vmul.f32 %v78, %v78
    %v111 = vmul.f32 %v79, %v79
    %v112 = vmul.f32 %v80, %v80
    %v113 = vmul.f32 %v81, %v81
    %v114 = vmul.f32 %v82, %v82
    %v115 = vmul.f32 %v83, %v83
    %v116 = vmul.f32 %v84, %v84
    %v117 = vmul.f32 %v85, %v85
    %v118 = vmul.f32 %v86, %v86
    %v119 = vmul.f32 %v87, %v87
    %v120 = vmul.f32 %v88, %v88
    %v121 = vmul.f32 %v89, %v89
    %v122 = vmul.f32 %v90, %v90
    %v123 = vmul.f32 %v91, %v91
    %v124 = vmul.f32 %v92, %v92
    %v125 = vmul.f32 %v93, %v93
    %v126 = vmul.f32 %v94, %v94
    %v127 = vmul.f32 %v95, %v95
    %v128 = vmul.f32 %v96, %v96
    %v129 = vmul.f32 %v97, %v97
    %v130 = vmul.f32 %v98, %v98
    %v131 = vmul.f32 %v99, %v99
    %v132 = vmul.f32 %v100, %v100
    %v133 = vmul.f32 %v101, %v101
    %v134 = vadd.f32 %v102, %v104
    %v135 = vadd.f32 %v134, %v106
    %v136 = vadd.f32 %v135, %v108
    %v137 = vadd.f32 %v136, %v110
    %v138 = vadd.f32 %v137, %v112
    %v139 = vadd.f32 %v138, %v114
    %v140 = vadd.f32 %v139, %v116
    %v141 = vadd.f32 %v140, %v118
    %v142 = vadd.f32 %v141, %v120
    %v143 = vadd.f32 %v142, %v122
    %v144 = vadd.f32 %v143, %v124
    %v145 = vadd.f32 %v144, %v126
    %v146 = vadd.f32 %v145, %v128
    %v147 = vadd.f32 %v146, %v130
    %v148 = vadd.f32 %v147, %v132
    %v149 = vrot.slane %v148, 4
    %v150 = vadd.f32 %v148, %v149
    %v151 = vrot.slane %v150, 2
    %v152 = vadd.f32 %v150, %v151
    %v153 = vrot.slane %v152, 1
    %v154 = vadd.f32 %v152, %v153
    %v155 = vadd.f32 %v103, %v105
    %v156 = vadd.f32 %v155, %v107
    %v157 = vadd.f32 %v156, %v109
    %v158 = vadd.f32 %v157, %v111
    %v159 = vadd.f32 %v158, %v113
    %v160 = vadd.f32 %v159, %v115
    %v161 = vadd.f32 %v160, %v117
    %v162 = vadd.f32 %v161, %v119
    %v163 = vadd.f32 %v162, %v121
    %v164 = vadd.f32 %v163, %v123
    %v165 = vadd.f32 %v164, %v125
    %v166 = vadd.f32 %v165, %v127
    %v167 = vadd.f32 %v166, %v129
    %v168 = vadd.f32 %v167, %v131
    %v169 = vadd.f32 %v168, %v133
    %v170 = vrot.slane %v169, 4
    %v171 = vadd.f32 %v169, %v170
    %v172 = vrot.slane %v171, 2
    %v173 = vadd.f32 %v171, %v172
    %v174 = vrot.slane %v173, 1
    %v175 = vadd.f32 %v173, %v174
    %v176 = vrsqrt.pop %v154
    %v177 = vmul.f32 %v154, %v176
    %vm178 = vcmp.eq.f32.partialorder %v154, inf
    %v179 = vsel %vm178, %v154, %v177
    %vm180 = vcmp.eq.f32.partialorder %v154, 0.0
    %v181 = vand.u32 %v154, 2147483648
    %v182 = vsel %vm180, %v181, %v179
    %v183 = vrsqrt.pop %v175
    %v184 = vmul.f32 %v175, %v183
    %vm185 = vcmp.eq.f32.partialorder %v175, inf
    %v186 = vsel %vm185, %v175, %v184
    %vm187 = vcmp.eq.f32.partialorder %v175, 0.0
    %v188 = vand.u32 %v175, 2147483648
    %v189 = vsel %vm187, %v188, %v186
    %v190 = vmax.f32 %v182, 1e-12
    %v191 = vmax.f32 %v189, 1e-12
    %v192 = vrcp.pop %v190
    %v193 = vmul.f32 1.0, %v192
    %v194 = vrcp.pop %v191
    %v195 = vmul.f32 1.0, %v194
    %v196 = vld [vmem:[#allocation6] sm:$0xff]
    %197 = vmatprep.subr.mxu0 %v71
    %198 = vmatpush1.msra.mxu0 %v70
    %199 = vmatprep.subr.mxu0 %v73
    %200 = vmatpush1.msra.mxu0 %v72
    %201 = vmatprep.subr.mxu0 %v75
    %202 = vmatpush1.msra.mxu0 %v74
    %203 = vmatprep.subr.mxu0 %v77
    %204 = vmatpush1.msra.mxu0 %v76
    %205 = vmatprep.subr.mxu0 %v79
    %206 = vmatpush1.msra.mxu0 %v78
    %207 = vmatprep.subr.mxu0 %v81
    %208 = vmatpush1.msra.mxu0 %v80
    %209 = vmatprep.subr.mxu0 %v83
    %210 = vmatpush1.msra.mxu0 %v82
    %211 = vmatprep.subr.mxu0 %v85
    %212 = vmatpush1.msra.mxu0 %v84
    %213 = vmatprep.subr.mxu0 %v87
    %214 = vmatpush1.msra.mxu0 %v86
    %215 = vmatprep.subr.mxu0 %v89
    %216 = vmatpush1.msra.mxu0 %v88
    %217 = vmatprep.subr.mxu0 %v91
    %218 = vmatpush1.msra.mxu0 %v90
    %219 = vmatprep.subr.mxu0 %v93
    %220 = vmatpush1.msra.mxu0 %v92
    %221 = vmatprep.subr.mxu0 %v95
    %222 = vmatpush1.msra.mxu0 %v94
    %223 = vmatprep.subr.mxu0 %v97
    %224 = vmatpush1.msra.mxu0 %v96
    %225 = vmatprep.subr.mxu0 %v99
    %226 = vmatpush1.msra.mxu0 %v98
    %227 = vmatprep.subr.mxu0 %v101
    %228 = vmatpush1.msra.mxu0 %v100
    %229 = vmatprep.subr.mxu0 0.0
    %230 = vmatpush1.msra.mxu0 0.0
    %231 = vmatprep.subr.mxu0 0.0
    %232 = vmatpush1.msra.mxu0 0.0
    %233 = vmatprep.subr.mxu0 0.0
    %234 = vmatpush1.msra.mxu0 0.0
    %235 = vmatprep.subr.mxu0 0.0
    %236 = vmatpush1.msra.mxu0 0.0
    %237 = vmatprep.subr.mxu0 0.0
    %238 = vmatpush1.msra.mxu0 0.0
    %239 = vmatprep.subr.mxu0 0.0
    %240 = vmatpush1.msra.mxu0 0.0
    %241 = vmatprep.subr.mxu0 0.0
    %242 = vmatpush1.msra.mxu0 0.0
    %243 = vmatprep.subr.mxu0 0.0
    %244 = vmatpush1.msra.mxu0 0.0
    %245 = vmatprep.subr.mxu0 0.0
    %246 = vmatpush1.msra.mxu0 0.0
    %247 = vmatprep.subr.mxu0 0.0
    %248 = vmatpush1.msra.mxu0 0.0
    %249 = vmatprep.subr.mxu0 0.0
    %250 = vmatpush1.msra.mxu0 0.0
    %251 = vmatprep.subr.mxu0 0.0
    %252 = vmatpush1.msra.mxu0 0.0
    %253 = vmatprep.subr.mxu0 0.0
    %254 = vmatpush1.msra.mxu0 0.0
    %255 = vmatprep.subr.mxu0 0.0
    %256 = vmatpush1.msra.mxu0 0.0
    %257 = vmatprep.subr.mxu0 0.0
    %258 = vmatpush1.msra.mxu0 0.0
    %259 = vmatprep.subr.mxu0 0.0
    %260 = vmatpush1.msra.mxu0 0.0
    %261 = vmatprep.mubr.f32.mxu0 0.0
    %262 = vmatmul.mubr.f32.gmra.mrb[0].mxu0 %v196
    %v263 = vpop.f32.mrb[0].mxu0
    %v264 = vadd.f32 0.0, %v263
    %v265 = vpop.f32.mrb[0].mxu0
    %v266 = vadd.f32 0.0, %v265
    %267 = vdwg.mxu0
    %v268 = vmul.f32 %v264, %v193
    %v269 = vmul.f32 %v266, %v195
    %v270 = vld [vmem:[#allocation3] sm:$0xff]
    %v271 = vld [vmem:[#allocation3 + $0x8] sm:$0xff]
    %v272 = vmax.f32 %v270, 0.0
    %v273 = vmax.f32 %v271, 0.0
    %v274 = vmul.f32 %v270, %v268
    %v275 = vmul.f32 %v271, %v269
    %v276 = vsub.f32 %v272, %v274
    %v277 = vsub.f32 %v273, %v275
    %v278 = vand.u32 2147483647, %v270
    %v279 = vand.u32 2147483647, %v271
    %v280 = vsub.f32 0.0, %v278
    %v281 = vsub.f32 0.0, %v279
    %v282 = vmul.f32 %v280, 1.442695
    %v283 = vpow.pop %v282
    %v284 = vmul.f32 %v281, 1.442695
    %v285 = vpow.pop %v284
    %v286 = vadd.f32 %v283, 1.0
    %v287 = vlog2.pop %v286
    %v288 = vmul.f32 %v287, 0.6931472
    %v289 = vmul.f32 -0.5, %v283
    %v290 = vadd.f32 %v289, 1.0
    %v291 = vmul.f32 %v290, %v283
    %v292 = vand.u32 2147483647, %v283
    %vm293 = vcmp.lt.f32.partialorder %v292, 0.0004427343
    %v294 = vsel %vm293, %v291, %v288
    %v295 = vadd.f32 %v285, 1.0
    %v296 = vlog2.pop %v295
    %v297 = vmul.f32 %v296, 0.6931472
    %v298 = vmul.f32 -0.5, %v285
    %v299 = vadd.f32 %v298, 1.0
    %v300 = vmul.f32 %v299, %v285
    %v301 = vand.u32 2147483647, %v285
    %vm302 = vcmp.lt.f32.partialorder %v301, 0.0004427343
    %v303 = vsel %vm302, %v300, %v297
    %v304 = vadd.f32 %v276, %v294
    %v305 = vadd.f32 %v277, %v303
    %v306 = vld [vmem:[#allocation2] sm:$0xff]
    %v307 = vld [vmem:[#allocation2 + $0x8] sm:$0xff]
    %v308 = vadd.f32 %v306, %v304
    %v309 = vadd.f32 %v307, %v305
    %310 = vst [vmem:[#allocation2] sm:$0xff] %v308
    %311 = vst [vmem:[#allocation2 + $0x8] sm:$0xff] %v309
    // Predicated region
    $region30: #{tpu_custom_call.1} parent=1 // pred_check
      %p312 = pneg %p64
    $region31: #{tpu_custom_call.1} parent=1 // pred_check_branch
      %314 = sbr.rel (%p312) target = $region33
    $region32: #{tpu_custom_call.1} parent=1 // pred_region
      %v315 = vld [vmem:[#allocation2] sm:$0xff]
      %v316 = vld [vmem:[#allocation2 + $0x8] sm:$0xff]
      %v317 = vadd.f32 %v315, %v316
      %318 = vadd.xlane.f32.xlu0 %v317
      %v319 = vpop.xlane.xlu0 %318
      %v320 = vrot.slane %v319, 4
      %v321 = vadd.f32 %v319, %v320
      %v322 = vrot.slane %v321, 2
      %v323 = vadd.f32 %v321, %v322
      %v324 = vrot.slane %v323, 1
      %v325 = vadd.f32 %v323, %v324
      %s326 = vtos %v325
      %s327 = smul.f32 %s326, 0.00048828125
      %v328 = vstv %s327
      %329 = vst [vmem:[#allocation9] sm:$0x1] %v328
    $region33: #{tpu_custom_call.1} parent=1 // pred_fallthru
      _
    // Predicated region
    $region34: #{tpu_custom_call.1} parent=1 // pred_check
      _
    $region35: #{tpu_custom_call.1} parent=1 // pred_check_branch
      %331 = sbr.rel (0) target = $region37
    $region36: #{tpu_custom_call.1} parent=1 // pred_region
      %s333 = ssub.s32 16, 16
      %334 = vsyncadd [#allocation5], %s333
      %s336 = sshll.u32 [#allocation9], 4
      %s337 = int_to_ptr.vmem [resolvable:$true] %s336
      %339 = dma.vmem_to_hbm [thread:$0]  %s337, 16, %s3, [#allocation5]
    $region37: #{tpu_custom_call.1} parent=1 // pred_fallthru
      _
    // Predicated region
    $region38: #{tpu_custom_call.1} parent=1 // pred_check
      _
    $region39: #{tpu_custom_call.1} parent=1 // pred_check_branch
      %341 = sbr.rel (0) target = $region41
    $region40: #{tpu_custom_call.1} parent=1 // pred_region
      %342 = dma.done [#allocation5], 16
    $region41: #{tpu_custom_call.1} parent=1 // pred_fallthru
      _
    %343 = vsyncpa [#allocation4], 1
    %344 = vsyncpa [#allocation7], 1
    %345 = vsyncpa [#allocation5], 1

</llo_original>
